<compile_context>
chip_gen: v5e
topology: v5e:2x2
jax: 0.10.0
libtpu: 0.0.40
codegen_flags: <defaults>
</compile_context>

<pallas_src>
import jax
import jax.numpy as jnp
from jax.experimental import pallas as pl
from jax.experimental.pallas import tpu as pltpu


def _patch_embed_kernel(p_ref, w_ref, b_ref, o_ref):
    # p_ref: (tm, Kp)   patch rows for this grid step
    # w_ref: (Kp, Ep)   flattened conv weight (zero-padded), resident across grid
    # b_ref: (1, Ep)    bias (zero-padded), resident across grid
    # o_ref: (tm, Ep)
    acc = jnp.dot(p_ref[...], w_ref[...], preferred_element_type=jnp.float32)
    o_ref[...] = (acc + b_ref[...]).astype(o_ref.dtype)


def _ceil_to(x, m):
    return ((x + m - 1) // m) * m


def _pick_row_tile(M, Kp, Ep, itemsize, vmem_budget_bytes):
    """Pick the M tile size: large, low padding waste, and VMEM-safe."""
    if M <= 256:
        tm = _ceil_to(M, 8)
    else:
        # Prefer the candidate with the least M-padding; break ties by larger tile.
        candidates = (512, 256)
        tm = min(candidates, key=lambda t: (_ceil_to(M, t) - M, -t))
    # Clamp against VMEM: weight + bias (single-buffered, resident) plus
    # double-buffered input/output tiles must fit the budget.
    while tm > 8:
        resident = (Kp * Ep + Ep) * itemsize
        tiles = 2 * (tm * Kp + tm * Ep) * itemsize
        if resident + tiles <= vmem_budget_bytes:
            break
        tm //= 2
    return max(tm, 8)


def patch_creation_forward(x, conv_weight, conv_bias, patch_size):
    """x: (N, C, H, W); conv_weight: (E, C, P, P) (PyTorch Conv2d layout); conv_bias: (E,)."""
    N, C, H, W = x.shape
    P = patch_size
    E = conv_weight.shape[0]
    Hp, Wp = H // P, W // P
    num_patches = Hp * Wp
    K = C * P * P
    M = N * num_patches

    # ---- patchify (layout plumbing, wrapper side; matches Conv2d weight flattening) ----
    # (N, C, Hp, P, Wp, P) -> (N, Hp, Wp, C, P, P) -> (M, K)
    patches = x.reshape(N, C, Hp, P, Wp, P)
    patches = patches.transpose(0, 2, 4, 1, 3, 5).reshape(M, K)
    w = conv_weight.reshape(E, K).T        # (K, E)
    b = conv_bias.reshape(1, E)

    # ---- pad to lane/sublane-friendly shapes ----
    Kp = _ceil_to(K, 128)                  # lane-dense input loads
    Ep = _ceil_to(E, 128)                  # lane-dense (unmasked) output stores

    itemsize = jnp.dtype(x.dtype).itemsize
    # Conservative budget: fits the default scoped-VMEM on every generation
    # (v5e default 16 MiB, v6e/v7x 32 MiB), leaving headroom for the compiler.
    vmem_budget = 14 * 1024 * 1024
    tm = _pick_row_tile(M, Kp, Ep, itemsize, vmem_budget)
    Mp = _ceil_to(M, tm)

    if Mp != M or Kp != K:
        patches = jnp.pad(patches, ((0, Mp - M), (0, Kp - K)))
    if Kp != K or Ep != E:
        w = jnp.pad(w, ((0, Kp - K), (0, Ep - E)))
    if Ep != E:
        b = jnp.pad(b, ((0, 0), (0, Ep - E)))

    grid = (Mp // tm,)

    cost = pl.CostEstimate(
        flops=2 * Mp * Kp * Ep,
        transcendentals=0,
        bytes_accessed=itemsize * (Mp * Kp + Kp * Ep + Ep + Mp * Ep),
    )

    out = pl.pallas_call(
        _patch_embed_kernel,
        out_shape=jax.ShapeDtypeStruct((Mp, Ep), x.dtype),
        grid_spec=pltpu.PrefetchScalarGridSpec(
            num_scalar_prefetch=0,
            grid=grid,
            in_specs=[
                pl.BlockSpec((tm, Kp), lambda i: (i, 0)),   # patch-row tile
                pl.BlockSpec((Kp, Ep), lambda i: (0, 0)),   # weight (resident)
                pl.BlockSpec((1, Ep), lambda i: (0, 0)),    # bias   (resident)
            ],
            out_specs=pl.BlockSpec((tm, Ep), lambda i: (i, 0)),
        ),
        compiler_params=pltpu.CompilerParams(
            # Independent M tiles -> megacore split on v7x; near-neutral on v5e/v6e.
            dimension_semantics=("parallel",),
            vmem_limit_bytes=32 * 1024 * 1024,
        ),
        cost_estimate=cost,
    )(patches, w, b)

    # un-pad and restore (N, num_patches, E) == conv.flatten(2).transpose(1, 2)
    return out[:M, :E].reshape(N, num_patches, E)


def _reference(x, conv_weight, conv_bias, patch_size):
    P = patch_size
    y = jax.lax.conv_general_dilated(
        x, conv_weight, window_strides=(P, P), padding="VALID",
        dimension_numbers=("NCHW", "OIHW", "NCHW"))
    y = y + conv_bias.reshape(1, -1, 1, 1)
    n, e, hp, wp = y.shape
    return y.reshape(n, e, hp * wp).transpose(0, 2, 1)


if __name__ == "__main__":
    # Small shapes consistent with the module:
    # batch=2, channels=4, image_size=16, patch_size=4, embed_size=32
    N, C, IMG, PATCH, EMBED = 2, 4, 16, 4, 32
    key = jax.random.PRNGKey(0)
    kx, kw, kb = jax.random.split(key, 3)

    x = jax.random.normal(kx, (N, C, IMG, IMG), dtype=jnp.float32)
    conv_w = jax.random.normal(kw, (EMBED, C, PATCH, PATCH), dtype=jnp.float32) * 0.05
    conv_b = jax.random.normal(kb, (EMBED,), dtype=jnp.float32) * 0.05

    out = patch_creation_forward(x, conv_w, conv_b, PATCH)
    out = jax.block_until_ready(out)

    ref = _reference(x, conv_w, conv_b, PATCH)
    num_patches = (IMG // PATCH) ** 2
    assert out.shape == (N, num_patches, EMBED), out.shape
    assert jnp.allclose(out, ref, atol=1e-4, rtol=1e-4), float(jnp.max(jnp.abs(out - ref)))
    print("KERNEL_OK")
</pallas_src>

<mosaic_0001>
module attributes {stable_mosaic.version = 11 : i64} {
  func.func @_patch_embed_kernel(%arg0: i32, %arg1: memref<32x128xf32, #tpu.memory_space<vmem>>, %arg2: memref<128x128xf32, #tpu.memory_space<vmem>>, %arg3: memref<1x128xf32, #tpu.memory_space<vmem>>, %arg4: memref<32x128xf32, #tpu.memory_space<vmem>>) attributes {dimension_semantics = [#tpu.dimension_semantics<parallel>], iteration_bounds = array<i64: 1>, scalar_prefetch = 0 : i64, scratch_operands = 0 : i64, tpu.core_type = #tpu.core_type<tc>, window_params = [{transform_indices = @transform_0, window_bounds = array<i64: 32, 128>}, {pipeline_mode = #tpu.pipeline_mode<synchronous>, transform_indices = @transform_1, window_bounds = array<i64: 128, 128>}, {pipeline_mode = #tpu.pipeline_mode<synchronous>, transform_indices = @transform_2, window_bounds = array<i64: 1, 128>}, {transform_indices = @transform_3, window_bounds = array<i64: 32, 128>}]} {
    %c0 = arith.constant 0 : index
    %c0_0 = arith.constant 0 : index
    %0 = vector.load %arg1[%c0, %c0_0] : memref<32x128xf32, #tpu.memory_space<vmem>>, vector<32x128xf32>
    %c0_1 = arith.constant 0 : index
    %c0_2 = arith.constant 0 : index
    %1 = vector.load %arg2[%c0_1, %c0_2] : memref<128x128xf32, #tpu.memory_space<vmem>>, vector<128x128xf32>
    %cst = arith.constant dense<0.000000e+00> : vector<32x128xf32>
    %2 = tpu.matmul %0, %1, %cst {dimension_numbers = #tpu.dot_dimension_numbers<[1], [0], [0], [1], [0, 0, 1, 1], [], []>} : vector<32x128xf32>, vector<128x128xf32>, vector<32x128xf32> -> vector<32x128xf32>
    %c0_3 = arith.constant 0 : index
    %c0_4 = arith.constant 0 : index
    %3 = vector.load %arg3[%c0_3, %c0_4] : memref<1x128xf32, #tpu.memory_space<vmem>>, vector<1x128xf32>
    %4 = vector.broadcast %3 : vector<1x128xf32> to vector<32x128xf32>
    %5 = arith.addf %2, %4 : vector<32x128xf32>
    %c0_5 = arith.constant 0 : index
    %c0_6 = arith.constant 0 : index
    %6 = vector.load %arg4[%c0_5, %c0_6] : memref<32x128xf32, #tpu.memory_space<vmem>>, vector<32x128xf32>
    tpu.vector_store %arg4[%c0_5, %c0_6], %5 {strides = array<i32>} : memref<32x128xf32, #tpu.memory_space<vmem>>, vector<32x128xf32>,
    return
  }
  func.func @transform_0(%arg0: i32) -> (i32, i32) {
    %c0_i32 = arith.constant 0 : i32
    %c0_i32_0 = arith.constant 0 : i32
    return %arg0, %c0_i32 : i32, i32
  }
  func.func @transform_1(%arg0: i32) -> (i32, i32) {
    %c0_i32 = arith.constant 0 : i32
    %c0_i32_0 = arith.constant 0 : i32
    %c0_i32_1 = arith.constant 0 : i32
    return %c0_i32, %c0_i32_0 : i32, i32
  }
  func.func @transform_2(%arg0: i32) -> (i32, i32) {
    %c0_i32 = arith.constant 0 : i32
    %c0_i32_0 = arith.constant 0 : i32
    %c0_i32_1 = arith.constant 0 : i32
    return %c0_i32, %c0_i32_0 : i32, i32
  }
  func.func @transform_3(%arg0: i32) -> (i32, i32) {
    %c0_i32 = arith.constant 0 : i32
    %c0_i32_0 = arith.constant 0 : i32
    return %arg0, %c0_i32 : i32, i32
  }
}

</mosaic_0001>

<llo_original>
// kernel: tpu_custom_call.1
$region0: #{tpu_custom_call.1}
  #allocation0 [shape = 'u32[]', space=smem, size = 0x4, offset = 0x4, fixed_abs, tag = 'smem constant byte address 0x4 - core index']
  #allocation1 [shape = 'u32[72,128]{1,0:T(1,128)}', space=vmem, size = 0x9000, scoped, tag = 'internal scratch']
  %s0 = inlined_call_operand.hbm [shape: f32[32,128], index: 0, kind: input, shape index: {}]
  %s1 = inlined_call_operand.hbm [shape: f32[128,128], index: 1, kind: input, shape index: {}]
  %s2 = inlined_call_operand.vmem [shape: f32[1,128], index: 2, kind: input, shape index: {}]
  %s3 = inlined_call_operand.hbm [shape: f32[32,128], index: 3, kind: output, shape index: {}]
  %s4 = sld [smem:[#allocation0]]
  $region30: #{tpu_custom_call.1} parent=0
    _
  %s6 = ssub.s32 1, %s4
  %s7 = scalar_select 0, %s6, %s4
  $region1: #{tpu_custom_call.1} parent=0
    #allocation2 [shape = 'u8[16384]{0}', space=vmem, size = 0x4000, scoped, tag = 'input window, operand 0, single buffered']
    #allocation3 [shape = 's32[1]{0}', space=sflag, size = 0x4, scoped, tag = 'scoped memory for tpu_custom_call.1']
    #allocation4 [shape = 's32[1]{0}', space=sflag, size = 0x4, scoped, tag = 'scoped memory for tpu_custom_call.1']
    #allocation5 [shape = 'u8[65536]{0}', space=vmem, size = 0x10000, scoped, tag = 'input window, operand 1, single buffered']
    #allocation6 [shape = 's32[1]{0}', space=sflag, size = 0x4, scoped, tag = 'scoped memory for tpu_custom_call.1']
    #allocation7 [shape = 'u8[16384]{0}', space=vmem, size = 0x4000, scoped, tag = 'output window, operand 0, single buffered']
    %8 = vsyncpa [#allocation3], 0
    %9 = vsyncpa [#allocation6], 0
    %10 = vsyncpa [#allocation4], 0
    // Predicated region
    $region2: #{tpu_custom_call.1} parent=1 // pred_check
      _
    $region3: #{tpu_custom_call.1} parent=1 // pred_check_branch
      %12 = sbr.rel (0) target = $region5
    $region4: #{tpu_custom_call.1} parent=1 // pred_region
      %14 = vsyncadd [#allocation3], 0
      %s15 = sshll.u32 %s0, 4
      %s16 = int_to_ptr.hbm [resolvable:$true] %s15
      %s17 = sshll.u32 [#allocation2], 4
      %s18 = int_to_ptr.vmem [resolvable:$true] %s17
      %23 = dma.hbm_to_vmem [thread:$0]  %s16, 512, %s18, [#allocation3], 128, 128, 8
    $region5: #{tpu_custom_call.1} parent=1 // pred_fallthru
      _
    // Predicated region
    $region6: #{tpu_custom_call.1} parent=1 // pred_check
      _
    $region7: #{tpu_custom_call.1} parent=1 // pred_check_branch
      %25 = sbr.rel (0) target = $region9
    $region8: #{tpu_custom_call.1} parent=1 // pred_region
      %27 = vsyncadd [#allocation6], 0
      %s28 = sshll.u32 %s1, 4
      %s29 = int_to_ptr.hbm [resolvable:$true] %s28
      %s30 = sshll.u32 [#allocation5], 4
      %s31 = int_to_ptr.vmem [resolvable:$true] %s30
      %36 = dma.hbm_to_vmem [thread:$0]  %s29, 2048, %s31, [#allocation6], 128, 128, 8
    $region9: #{tpu_custom_call.1} parent=1 // pred_fallthru
      _
    // Predicated region
    $region10: #{tpu_custom_call.1} parent=1 // pred_check
      _
    $region11: #{tpu_custom_call.1} parent=1 // pred_check_branch
      %38 = sbr.rel (0) target = $region13
    $region12: #{tpu_custom_call.1} parent=1 // pred_region
      _
    $region13: #{tpu_custom_call.1} parent=1 // pred_fallthru
      _
    // Predicated region
    $region14: #{tpu_custom_call.1} parent=1 // pred_check
      _
    $region15: #{tpu_custom_call.1} parent=1 // pred_check_branch
      %40 = sbr.rel (0) target = $region17
    $region16: #{tpu_custom_call.1} parent=1 // pred_region
      %42 = dma.done [#allocation3], 512
    $region17: #{tpu_custom_call.1} parent=1 // pred_fallthru
      _
    // Predicated region
    $region18: #{tpu_custom_call.1} parent=1 // pred_check
      _
    $region19: #{tpu_custom_call.1} parent=1 // pred_check_branch
      %44 = sbr.rel (0) target = $region21
    $region20: #{tpu_custom_call.1} parent=1 // pred_region
      %46 = dma.done [#allocation6], 2048
    $region21: #{tpu_custom_call.1} parent=1 // pred_fallthru
      _
    %v47 = vld [vmem:[#allocation2] sm:$0xff]
    %v48 = vld [vmem:[#allocation2 + $0x8] sm:$0xff]
    %v49 = vld [vmem:[#allocation2 + $0x10] sm:$0xff]
    %v50 = vld [vmem:[#allocation2 + $0x18] sm:$0xff]
    %v51 = vld [vmem:[#allocation5] sm:$0xff]
    %v52 = vld [vmem:[#allocation5 + $0x8] sm:$0xff]
    %v53 = vld [vmem:[#allocation5 + $0x10] sm:$0xff]
    %v54 = vld [vmem:[#allocation5 + $0x18] sm:$0xff]
    %v55 = vld [vmem:[#allocation5 + $0x20] sm:$0xff]
    %v56 = vld [vmem:[#allocation5 + $0x28] sm:$0xff]
    %v57 = vld [vmem:[#allocation5 + $0x30] sm:$0xff]
    %v58 = vld [vmem:[#allocation5 + $0x38] sm:$0xff]
    %v59 = vld [vmem:[#allocation5 + $0x40] sm:$0xff]
    %v60 = vld [vmem:[#allocation5 + $0x48] sm:$0xff]
    %v61 = vld [vmem:[#allocation5 + $0x50] sm:$0xff]
    %v62 = vld [vmem:[#allocation5 + $0x58] sm:$0xff]
    %v63 = vld [vmem:[#allocation5 + $0x60] sm:$0xff]
    %v64 = vld [vmem:[#allocation5 + $0x68] sm:$0xff]
    %v65 = vld [vmem:[#allocation5 + $0x70] sm:$0xff]
    %v66 = vld [vmem:[#allocation5 + $0x78] sm:$0xff]
    %v67 = vld [vmem:[%s2] sm:$0x1]
    %v69 = vperm.slane %v67, 0
    %71 = vmatpush.msra.mxu0 %v66
    %72 = vmatpush.msra.mxu0 %v65
    %73 = vmatpush.msra.mxu0 %v64
    %74 = vmatpush.msra.mxu0 %v63
    %75 = vmatpush.msra.mxu0 %v62
    %76 = vmatpush.msra.mxu0 %v61
    %77 = vmatpush.msra.mxu0 %v60
    %78 = vmatpush.msra.mxu0 %v59
    %79 = vmatpush.msra.mxu0 %v58
    %80 = vmatpush.msra.mxu0 %v57
    %81 = vmatpush.msra.mxu0 %v56
    %82 = vmatpush.msra.mxu0 %v55
    %83 = vmatpush.msra.mxu0 %v54
    %84 = vmatpush.msra.mxu0 %v53
    %85 = vmatpush.msra.mxu0 %v52
    %86 = vmatpush.msra.mxu0 %v51
    %87 = vmatmul.f32.gmra.mxu0 %v47
    %v88 = vpop.f32.mrf.mxu0
    %v89 = vadd.f32 %v69, %v88
    %90 = vmatmul.f32.gmra.mxu0 %v48
    %v91 = vpop.f32.mrf.mxu0
    %v92 = vadd.f32 %v69, %v91
    %93 = vmatmul.f32.gmra.mxu0 %v49
    %v94 = vpop.f32.mrf.mxu0
    %v95 = vadd.f32 %v69, %v94
    %96 = vmatmul.f32.gmra.mxu0 %v50
    %v97 = vpop.f32.mrf.mxu0
    %v98 = vadd.f32 %v69, %v97
    %99 = vdwg.mxu0
    %100 = vst [vmem:[#allocation7] sm:$0xff] %v89
    %101 = vst [vmem:[#allocation7 + $0x8] sm:$0xff] %v92
    %102 = vst [vmem:[#allocation7 + $0x10] sm:$0xff] %v95
    %103 = vst [vmem:[#allocation7 + $0x18] sm:$0xff] %v98
    // Predicated region
    $region22: #{tpu_custom_call.1} parent=1 // pred_check
      _
    $region23: #{tpu_custom_call.1} parent=1 // pred_check_branch
      %105 = sbr.rel (0) target = $region25
    $region24: #{tpu_custom_call.1} parent=1 // pred_region
      %107 = vsyncadd [#allocation4], 0
      %s108 = sshll.u32 [#allocation7], 4
      %s109 = int_to_ptr.vmem [resolvable:$true] %s108
      %s110 = sshll.u32 %s3, 4
      %s111 = int_to_ptr.hbm [resolvable:$true] %s110
      %116 = dma.vmem_to_hbm [thread:$0]  %s109, 512, %s111, [#allocation4], 128, 128, 8
    $region25: #{tpu_custom_call.1} parent=1 // pred_fallthru
      _
    // Predicated region
    $region26: #{tpu_custom_call.1} parent=1 // pred_check
      _
    $region27: #{tpu_custom_call.1} parent=1 // pred_check_branch
      %118 = sbr.rel (0) target = $region29
    $region28: #{tpu_custom_call.1} parent=1 // pred_region
      %120 = dma.done [#allocation4], 512
    $region29: #{tpu_custom_call.1} parent=1 // pred_fallthru
      _
    %121 = vsyncpa [#allocation3], 1
    %122 = vsyncpa [#allocation6], 1
    %123 = vsyncpa [#allocation4], 1

</llo_original>
